<compile_context>
chip_gen: v7x
topology: tpu7x:2x2x1
jax: 0.10.0
libtpu: 0.0.40
codegen_flags: <defaults>
</compile_context>

<pallas_src>
import jax
import jax.numpy as jnp
from jax.experimental import pallas as pl
from jax.experimental.pallas import tpu as pltpu

NEG_SLOPE = 0.01  # nn.LeakyReLU default


def classifier_kernel(x_ref, w1_ref, b1_ref, w2t_ref, b2_ref, o_ref):
    # x_ref:   (TB, S, D)    embeds tile (bf16 or f32)       VMEM
    # w1_ref:  (1, S)        dense1.weight, bf16 (pre-cast)  VMEM (resident)
    # b1_ref:  (1, 1)        dense1.bias, f32                SMEM
    # w2t_ref: (D, Opad)     dense2.weight.T zero-padded f32 VMEM (resident)
    # b2_ref:  (1, Opad)     dense2.bias zero-padded, f32    VMEM (resident)
    # o_ref:   (TB, Opad)    output, f32 (lane-dense)        VMEM
    x = x_ref[...]                                      # (TB, S, D)
    tb, s, _ = x.shape

    # dense1: contract S on the MXU.
    #   lhs = w1 broadcast to (TB, 1, S) in x's dtype (no-op when x is bf16),
    #   rhs = x (TB, S, D) in its natural layout  ->  (TB, 1, D), f32 acc.
    w1 = w1_ref[...].astype(x.dtype)                    # (1, S)
    w1b = jnp.broadcast_to(w1[None, :, :], (tb, 1, s))  # (TB, 1, S)
    feats = jnp.einsum('bqs,bsd->bqd', w1b, x,
                       preferred_element_type=jnp.float32)[:, 0, :]  # (TB, D)

    # bias + LeakyReLU in f32 on the (mostly idle) VPU slots.
    feats = feats + b1_ref[0, 0]
    feats = jnp.where(feats >= 0, feats, NEG_SLOPE * feats)

    # dense2: (TB, D) @ (D, Opad) on the MXU, lane-dense output block.
    out = jnp.dot(feats, w2t_ref[...], preferred_element_type=jnp.float32)
    o_ref[...] = (out + b2_ref[...]).astype(o_ref.dtype)


def prepare_params(w1, b1, w2, b2, *, lane_pad=128):
    """One-time parameter layout prep (call at init, NOT per forward)."""
    O, D = w2.shape
    o_pad = max(lane_pad, ((O + lane_pad - 1) // lane_pad) * lane_pad)

    w1p = jnp.asarray(w1, jnp.float32).reshape(1, -1).astype(jnp.bfloat16)  # (1, S)
    b1p = jnp.asarray(b1, jnp.float32).reshape(1, 1)                        # (1, 1) SMEM scalar
    w2t = jnp.asarray(w2, jnp.float32).T                                    # (D, O)
    w2tp = jnp.zeros((D, o_pad), jnp.float32).at[:, :O].set(w2t)            # (D, Opad) lane-dense
    b2p = jnp.zeros((1, o_pad), jnp.float32).at[0, :O].set(
        jnp.asarray(b2, jnp.float32).reshape(-1))                           # (1, Opad)
    return (w1p, b1p, w2tp, b2p, O)


def _vmem_policy():
    """Per-generation (scoped_vmem_limit, embeds_double_buffer_budget, force_two_steps)."""
    vmem_cap = 64 << 20  # conservative default = v7x per-TC VMEM
    try:
        info = pltpu.get_tpu_info()
        for attr in ("vmem_capacity_bytes", "vmem_bytes", "vmem_size_bytes"):
            v = getattr(info, attr, None)
            if v:
                vmem_cap = int(v)
                break
    except Exception:
        pass
    if vmem_cap >= (100 << 20):
        # v5e / v6e: 128 MiB physical VMEM -> big tiles, fewer grid steps.
        return 96 << 20, 48 << 20, False
    # v7x-like: 64 MiB / TensorCore -> tighter budget; force >=2 grid steps so
    # the "parallel" batch axis can shard across the 2 TCs per chip.
    return 32 << 20, 22 << 20, True


def _pick_batch_tile(B, budget_bytes, bytes_per_batch_row, force_two_steps):
    """Largest multiple-of-8 batch tile whose double-buffered embeds blocks fit the budget."""
    cap = budget_bytes // (2 * bytes_per_batch_row)     # 2x for double buffering
    cap = max(8, (cap // 8) * 8)
    if force_two_steps and B >= 16:
        half = (-(-B // 2) + 7) // 8 * 8                # round_up(ceil(B/2), 8)
        cap = min(cap, half)
    if B <= cap:
        return B        # single full block: block dim == full array dim (always legal)
    return cap          # multiple of 8; pl.cdiv grid + masking handle trailing partial block


def classifier_forward(embeds, params, *, batch_tile=None):
    """embeds: (B, 103, 768) in bf16 or f32; params from prepare_params()."""
    w1, b1, w2t, b2, O = params
    B, S, D = embeds.shape
    o_pad = w2t.shape[1]

    vmem_limit, budget, force_two = _vmem_policy()
    if batch_tile is None:
        batch_tile = _pick_batch_tile(
            B, budget, S * D * embeds.dtype.itemsize, force_two)

    out_padded = pl.pallas_call(
        classifier_kernel,
        out_shape=jax.ShapeDtypeStruct((B, o_pad), jnp.float32),
        grid=(pl.cdiv(B, batch_tile),),
        in_specs=[
            pl.BlockSpec((batch_tile, S, D), lambda i: (i, 0, 0)),   # embeds tile (pipelined)
            pl.BlockSpec((1, S), lambda i: (0, 0)),                  # w1 bf16 (resident)
            pl.BlockSpec(memory_space=pltpu.MemorySpace.SMEM),       # b1 scalar
            pl.BlockSpec((D, o_pad), lambda i: (0, 0)),              # w2^T padded (resident)
            pl.BlockSpec((1, o_pad), lambda i: (0, 0)),              # b2 padded (resident)
        ],
        out_specs=pl.BlockSpec((batch_tile, o_pad), lambda i: (i, 0)),
        compiler_params=pltpu.CompilerParams(
            dimension_semantics=("parallel",),    # batch axis: megacore-shardable
            vmem_limit_bytes=vmem_limit,
        ),
    )(embeds, w1, b1, w2t, b2)

    return out_padded[:, :O]


def reference_forward(embeds, w1, b1, w2, b2):
    x = jnp.transpose(embeds, (0, 2, 1))                      # (B, D, S)
    f = jnp.einsum('bds,os->bdo', x, w1) + b1                 # (B, D, 1)
    f = jnp.squeeze(jnp.transpose(f, (0, 2, 1)), axis=1)      # (B, D)
    f = jnp.where(f > 0, f, NEG_SLOPE * f)
    return f @ w2.T + b2                                      # (B, O)


if __name__ == "__main__":
    B, S, D, O = 2, 103, 768, 20

    key = jax.random.PRNGKey(0)
    k_x, k_w1, k_b1, k_w2, k_b2 = jax.random.split(key, 5)

    # Deterministic synthetic parameters (shapes from the module __init__).
    embeds_f32 = jax.random.normal(k_x, (B, S, D), dtype=jnp.float32)
    w1 = jax.random.uniform(k_w1, (1, S), minval=-1.0, maxval=1.0) / jnp.sqrt(S)
    b1 = jax.random.uniform(k_b1, (1,), minval=-1.0, maxval=1.0) / jnp.sqrt(S)
    w2 = jax.random.uniform(k_w2, (O, D), minval=-1.0, maxval=1.0) / jnp.sqrt(D)
    b2 = jax.random.uniform(k_b2, (O,), minval=-1.0, maxval=1.0) / jnp.sqrt(D)
    # NOTE: dense1_i / dense1_t from __init__ are unused in forward -> omitted.

    params = prepare_params(w1, b1, w2, b2)       # one-time layout prep (bf16 w1, 128-padded dense2)
    embeds = embeds_f32.astype(jnp.bfloat16)      # bf16 storage halves HBM DMA

    out = classifier_forward(embeds, params)
    out = jax.block_until_ready(out)

    # Reference on the same bf16-rounded activations, all-f32 math.
    ref = reference_forward(embeds.astype(jnp.float32), w1, b1, w2, b2)
    assert out.shape == (B, O)
    max_err = float(jnp.max(jnp.abs(out - ref)))
    assert jnp.allclose(out, ref, atol=3e-2, rtol=3e-2), (
        f"mismatch vs reference, max abs err = {max_err}")

    print("KERNEL_OK")
</pallas_src>

<mosaic_0001>
module attributes {stable_mosaic.version = 11 : i64} {
  func.func @classifier_kernel(%arg0: i32, %arg1: memref<2x103x768xbf16, #tpu.memory_space<vmem>>, %arg2: memref<1x103xbf16, #tpu.memory_space<vmem>>, %arg3: memref<1x1xf32, #tpu.memory_space<smem>>, %arg4: memref<768x128xf32, #tpu.memory_space<vmem>>, %arg5: memref<1x128xf32, #tpu.memory_space<vmem>>, %arg6: memref<2x128xf32, #tpu.memory_space<vmem>>) attributes {dimension_semantics = [#tpu.dimension_semantics<parallel>], iteration_bounds = array<i64: 1>, scalar_prefetch = 0 : i64, scratch_operands = 0 : i64, tpu.core_type = #tpu.core_type<tc>, window_params = [{transform_indices = @transform_0, window_bounds = array<i64: 2, 103, 768>}, {pipeline_mode = #tpu.pipeline_mode<synchronous>, transform_indices = @transform_1, window_bounds = array<i64: 1, 103>}, {transform_indices = @transform_2, window_bounds = array<i64: 1, 1>}, {pipeline_mode = #tpu.pipeline_mode<synchronous>, transform_indices = @transform_3, window_bounds = array<i64: 768, 128>}, {pipeline_mode = #tpu.pipeline_mode<synchronous>, transform_indices = @transform_4, window_bounds = array<i64: 1, 128>}, {transform_indices = @transform_5, window_bounds = array<i64: 2, 128>}]} {
    %c0 = arith.constant 0 : index
    %c0_0 = arith.constant 0 : index
    %c0_1 = arith.constant 0 : index
    %0 = vector.load %arg1[%c0, %c0_0, %c0_1] : memref<2x103x768xbf16, #tpu.memory_space<vmem>>, vector<2x103x768xbf16>
    %c0_2 = arith.constant 0 : index
    %c0_3 = arith.constant 0 : index
    %1 = vector.load %arg2[%c0_2, %c0_3] : memref<1x103xbf16, #tpu.memory_space<vmem>>, vector<1x103xbf16>
    %2 = vector.shape_cast %1 : vector<1x103xbf16> to vector<1x1x103xbf16>
    %3 = vector.shape_cast %2 : vector<1x1x103xbf16> to vector<1x1x103xbf16>
    %4 = vector.broadcast %3 : vector<1x1x103xbf16> to vector<2x1x103xbf16>
    "tpu.trace_start"() <{level = 10 : i32, message = "bqs,bsd->bqd"}> : () -> ()
    %cst = arith.constant dense<0.000000e+00> : vector<2x1x768xf32>
    %5 = tpu.matmul %4, %0, %cst {dimension_numbers = #tpu.dot_dimension_numbers<[2], [1], [1], [2], [0, 0, 0, 1, 1, 2], [0], [0]>} : vector<2x1x103xbf16>, vector<2x103x768xbf16>, vector<2x1x768xf32> -> vector<2x1x768xf32>
    "tpu.trace_stop"() : () -> ()
    %6 = vector.shape_cast %5 : vector<2x1x768xf32> to vector<2x768xf32>
    %c0_4 = arith.constant 0 : index
    %c0_5 = arith.constant 0 : index
    %7 = memref.load %arg3[%c0_4, %c0_5] : memref<1x1xf32, #tpu.memory_space<smem>>
    %8 = vector.broadcast %7 : f32 to vector<2x768xf32>
    %9 = arith.addf %6, %8 : vector<2x768xf32>
    %cst_6 = arith.constant 0.000000e+00 : f32
    %10 = vector.broadcast %cst_6 : f32 to vector<2x768xf32>
    %11 = arith.cmpf oge, %9, %10 : vector<2x768xf32>
    %cst_7 = arith.constant 0.00999999977 : f32
    %12 = vector.broadcast %cst_7 : f32 to vector<2x768xf32>
    %13 = arith.mulf %12, %9 : vector<2x768xf32>
    %14 = arith.select %11, %9, %13 : vector<2x768xi1>, vector<2x768xf32>
    %c0_8 = arith.constant 0 : index
    %c0_9 = arith.constant 0 : index
    %15 = vector.load %arg4[%c0_8, %c0_9] : memref<768x128xf32, #tpu.memory_space<vmem>>, vector<768x128xf32>
    %cst_10 = arith.constant dense<0.000000e+00> : vector<2x128xf32>
    %16 = tpu.matmul %14, %15, %cst_10 {dimension_numbers = #tpu.dot_dimension_numbers<[1], [0], [0], [1], [0, 0, 1, 1], [], []>} : vector<2x768xf32>, vector<768x128xf32>, vector<2x128xf32> -> vector<2x128xf32>
    %c0_11 = arith.constant 0 : index
    %c0_12 = arith.constant 0 : index
    %17 = vector.load %arg5[%c0_11, %c0_12] : memref<1x128xf32, #tpu.memory_space<vmem>>, vector<1x128xf32>
    %18 = vector.broadcast %17 : vector<1x128xf32> to vector<2x128xf32>
    %19 = arith.addf %16, %18 : vector<2x128xf32>
    %c0_13 = arith.constant 0 : index
    %c0_14 = arith.constant 0 : index
    %20 = vector.load %arg6[%c0_13, %c0_14] : memref<2x128xf32, #tpu.memory_space<vmem>>, vector<2x128xf32>
    tpu.vector_store %arg6[%c0_13, %c0_14], %19 {strides = array<i32>} : memref<2x128xf32, #tpu.memory_space<vmem>>, vector<2x128xf32>,
    return
  }
  func.func @transform_0(%arg0: i32) -> (i32, i32, i32) {
    %c0_i32 = arith.constant 0 : i32
    %c0_i32_0 = arith.constant 0 : i32
    %c0_i32_1 = arith.constant 0 : i32
    return %arg0, %c0_i32, %c0_i32_0 : i32, i32, i32
  }
  func.func @transform_1(%arg0: i32) -> (i32, i32) {
    %c0_i32 = arith.constant 0 : i32
    %c0_i32_0 = arith.constant 0 : i32
    %c0_i32_1 = arith.constant 0 : i32
    return %c0_i32, %c0_i32_0 : i32, i32
  }
  func.func @transform_2(%arg0: i32) -> (i32, i32) {
    %c0_i32 = arith.constant 0 : i32
    %c0_i32_0 = arith.constant 0 : i32
    %c0_i32_1 = arith.constant 0 : i32
    return %c0_i32, %c0_i32_0 : i32, i32
  }
  func.func @transform_3(%arg0: i32) -> (i32, i32) {
    %c0_i32 = arith.constant 0 : i32
    %c0_i32_0 = arith.constant 0 : i32
    %c0_i32_1 = arith.constant 0 : i32
    return %c0_i32, %c0_i32_0 : i32, i32
  }
  func.func @transform_4(%arg0: i32) -> (i32, i32) {
    %c0_i32 = arith.constant 0 : i32
    %c0_i32_0 = arith.constant 0 : i32
    %c0_i32_1 = arith.constant 0 : i32
    return %c0_i32, %c0_i32_0 : i32, i32
  }
  func.func @transform_5(%arg0: i32) -> (i32, i32) {
    %c0_i32 = arith.constant 0 : i32
    %c0_i32_0 = arith.constant 0 : i32
    return %arg0, %c0_i32 : i32, i32
  }
}

</mosaic_0001>

<llo_original>
// kernel: tpu_custom_call.1
$region0: #{tpu_custom_call.1}
  #allocation0 [shape = 'u32[]', space=smem, size = 0x4, offset = 0x4, fixed_abs, tag = 'smem constant byte address 0x4 - core index']
  #allocation1 [shape = 'u32[144,128]{1,0:T(1,128)}', space=vmem, size = 0x12000, scoped, tag = 'internal scratch']
  #allocation2 [shape = 'f32[1,1]{1,0:T(1,128)S(6)}', space=smem, size = 0x200, scoped, tag = 'scoped memory for tpu_custom_call.1']
  %s0 = inlined_call_operand.vmem [shape: bf16[2,103,768], index: 0, kind: input, shape index: {}]
  %s1 = inlined_call_operand.vmem [shape: bf16[1,103], index: 1, kind: input, shape index: {}]
  %s2 = inlined_call_operand.<no memory space> [shape: f32[1,1], index: 2, kind: input, shape index: {}]
  %s3 = inlined_call_operand.vmem [shape: f32[768,128], index: 3, kind: input, shape index: {}]
  %s4 = inlined_call_operand.vmem [shape: f32[1,128], index: 4, kind: input, shape index: {}]
  %s5 = inlined_call_operand.hbm [shape: f32[2,128], index: 5, kind: output, shape index: {}]
  %s6 = sld [smem:[#allocation0]]
  $region30: #{tpu_custom_call.1} parent=0
    _
  %s8 = ssub.s32 1, %s6
  %s9 = scalar_select 0, %s8, %s6
  %10 = sst [smem:[#allocation2]] %s2
  $region1: #{tpu_custom_call.1} parent=0
    #allocation3 [shape = 'u8[1024]{0}', space=vmem, size = 0x400, scoped, tag = 'output window, operand 0, single buffered']
    #allocation4 [shape = 's32[1]{0}', space=sflag, size = 0x4, scoped, tag = 'scoped memory for tpu_custom_call.1']
    %11 = vsyncpa [#allocation4], 0
    // Predicated region
    $region2: #{tpu_custom_call.1} parent=1 // pred_check
      _
    $region3: #{tpu_custom_call.1} parent=1 // pred_check_branch
      %13 = sbr.rel (0) target = $region5
    $region4: #{tpu_custom_call.1} parent=1 // pred_region
      _
    $region5: #{tpu_custom_call.1} parent=1 // pred_fallthru
      _
    // Predicated region
    $region6: #{tpu_custom_call.1} parent=1 // pred_check
      _
    $region7: #{tpu_custom_call.1} parent=1 // pred_check_branch
      %15 = sbr.rel (0) target = $region9
    $region8: #{tpu_custom_call.1} parent=1 // pred_region
      _
    $region9: #{tpu_custom_call.1} parent=1 // pred_fallthru
      _
    // Predicated region
    $region10: #{tpu_custom_call.1} parent=1 // pred_check
      _
    $region11: #{tpu_custom_call.1} parent=1 // pred_check_branch
      %17 = sbr.rel (0) target = $region13
    $region12: #{tpu_custom_call.1} parent=1 // pred_region
      _
    $region13: #{tpu_custom_call.1} parent=1 // pred_fallthru
      _
    // Predicated region
    $region14: #{tpu_custom_call.1} parent=1 // pred_check
      _
    $region15: #{tpu_custom_call.1} parent=1 // pred_check_branch
      %19 = sbr.rel (0) target = $region17
    $region16: #{tpu_custom_call.1} parent=1 // pred_region
      _
    $region17: #{tpu_custom_call.1} parent=1 // pred_fallthru
      _
    // Predicated region
    $region18: #{tpu_custom_call.1} parent=1 // pred_check
      _
    $region19: #{tpu_custom_call.1} parent=1 // pred_check_branch
      %21 = sbr.rel (0) target = $region21
    $region20: #{tpu_custom_call.1} parent=1 // pred_region
      _
    $region21: #{tpu_custom_call.1} parent=1 // pred_fallthru
      _
    %v23 = vld [vmem:[%s0] sm:$0xff]
    %v24 = vld [vmem:[%s0 + $0x8] sm:$0xff]
    %v25 = vld [vmem:[%s0 + $0x10] sm:$0xff]
    %v26 = vld [vmem:[%s0 + $0x18] sm:$0xff]
    %v27 = vld [vmem:[%s0 + $0x20] sm:$0xff]
    %v28 = vld [vmem:[%s0 + $0x28] sm:$0xff]
    %v29 = vld [vmem:[%s0 + $0x30] sm:$0xff]
    %v30 = vld [vmem:[%s0 + $0x38] sm:$0xff]
    %v31 = vld [vmem:[%s0 + $0x40] sm:$0xff]
    %v32 = vld [vmem:[%s0 + $0x48] sm:$0xff]
    %v33 = vld [vmem:[%s0 + $0x50] sm:$0xff]
    %v34 = vld [vmem:[%s0 + $0x58] sm:$0xff]
    %v35 = vld [vmem:[%s0 + $0x60] sm:$0xff]
    %v36 = vld [vmem:[%s0 + $0x68] sm:$0xff]
    %v37 = vld [vmem:[%s0 + $0x70] sm:$0xff]
    %v38 = vld [vmem:[%s0 + $0x78] sm:$0xff]
    %v39 = vld [vmem:[%s0 + $0x80] sm:$0xff]
    %v40 = vld [vmem:[%s0 + $0x88] sm:$0xff]
    %v41 = vld [vmem:[%s0 + $0x90] sm:$0xff]
    %v42 = vld [vmem:[%s0 + $0x98] sm:$0xff]
    %v43 = vld [vmem:[%s0 + $0xa0] sm:$0xff]
    %v44 = vld [vmem:[%s0 + $0xa8] sm:$0xff]
    %v45 = vld [vmem:[%s0 + $0xb0] sm:$0xff]
    %v46 = vld [vmem:[%s0 + $0xb8] sm:$0xff]
    %v47 = vld [vmem:[%s0 + $0xc0] sm:$0xff]
    %v48 = vld [vmem:[%s0 + $0xc8] sm:$0xff]
    %v49 = vld [vmem:[%s0 + $0xd0] sm:$0xff]
    %v50 = vld [vmem:[%s0 + $0xd8] sm:$0xff]
    %v51 = vld [vmem:[%s0 + $0xe0] sm:$0xff]
    %v52 = vld [vmem:[%s0 + $0xe8] sm:$0xff]
    %v53 = vld [vmem:[%s0 + $0xf0] sm:$0xff]
    %v54 = vld [vmem:[%s0 + $0xf8] sm:$0xff]
    %v55 = vld [vmem:[%s0 + $0x100] sm:$0xff]
    %v56 = vld [vmem:[%s0 + $0x108] sm:$0xff]
    %v57 = vld [vmem:[%s0 + $0x110] sm:$0xff]
    %v58 = vld [vmem:[%s0 + $0x118] sm:$0xff]
    %v59 = vld [vmem:[%s0 + $0x120] sm:$0xff]
    %v60 = vld [vmem:[%s0 + $0x128] sm:$0xff]
    %v61 = vld [vmem:[%s0 + $0x130] sm:$0xff]
    %v62 = vld [vmem:[%s0 + $0x138] sm:$0xff]
    %v63 = vld [vmem:[%s0 + $0x140] sm:$0xff]
    %v64 = vld [vmem:[%s0 + $0x148] sm:$0xff]
    %v65 = vld [vmem:[%s0 + $0x150] sm:$0xff]
    %v66 = vld [vmem:[%s0 + $0x158] sm:$0xff]
    %v67 = vld [vmem:[%s0 + $0x160] sm:$0xff]
    %v68 = vld [vmem:[%s0 + $0x168] sm:$0xff]
    %v69 = vld [vmem:[%s0 + $0x170] sm:$0xff]
    %v70 = vld [vmem:[%s0 + $0x178] sm:$0xff]
    %v71 = vld [vmem:[%s0 + $0x180] sm:$0xff]
    %v72 = vld [vmem:[%s0 + $0x188] sm:$0xff]
    %v73 = vld [vmem:[%s0 + $0x190] sm:$0xff]
    %v74 = vld [vmem:[%s0 + $0x198] sm:$0xff]
    %v75 = vld [vmem:[%s0 + $0x1a0] sm:$0xff]
    %v76 = vld [vmem:[%s0 + $0x1a8] sm:$0xff]
    %v77 = vld [vmem:[%s0 + $0x1b0] sm:$0xff]
    %v78 = vld [vmem:[%s0 + $0x1b8] sm:$0xff]
    %v79 = vld [vmem:[%s0 + $0x1c0] sm:$0xff]
    %v80 = vld [vmem:[%s0 + $0x1c8] sm:$0xff]
    %v81 = vld [vmem:[%s0 + $0x1d0] sm:$0xff]
    %v82 = vld [vmem:[%s0 + $0x1d8] sm:$0xff]
    %v83 = vld [vmem:[%s0 + $0x1e0] sm:$0xff]
    %v84 = vld [vmem:[%s0 + $0x1e8] sm:$0xff]
    %v85 = vld [vmem:[%s0 + $0x1f0] sm:$0xff]
    %v86 = vld [vmem:[%s0 + $0x1f8] sm:$0xff]
    %v87 = vld [vmem:[%s0 + $0x200] sm:$0xff]
    %v88 = vld [vmem:[%s0 + $0x208] sm:$0xff]
    %v89 = vld [vmem:[%s0 + $0x210] sm:$0xff]
    %v90 = vld [vmem:[%s0 + $0x218] sm:$0xff]
    %v91 = vld [vmem:[%s0 + $0x220] sm:$0xff]
    %v92 = vld [vmem:[%s0 + $0x228] sm:$0xff]
    %v93 = vld [vmem:[%s0 + $0x230] sm:$0xff]
    %v94 = vld [vmem:[%s0 + $0x238] sm:$0xff]
    %v95 = vld [vmem:[%s0 + $0x240] sm:$0xff]
    %v96 = vld [vmem:[%s0 + $0x248] sm:$0xff]
    %v97 = vld [vmem:[%s0 + $0x250] sm:$0xff]
    %v98 = vld [vmem:[%s0 + $0x258] sm:$0xff]
    %v99 = vld [vmem:[%s0 + $0x260] sm:$0xff]
    %v100 = vld [vmem:[%s0 + $0x268] sm:$0xff]
    %v101 = vld [vmem:[%s1] sm:$0x1]
    %v141 = vunpack.c.l.b16 %v23
    %v142 = vunpack.c.h.b16 %v23
    %v143 = vunpack.c.l.b16 %v24
    %v144 = vunpack.c.h.b16 %v24
    %v145 = vunpack.c.l.b16 %v25
    %v146 = vunpack.c.h.b16 %v25
    %v147 = vunpack.c.l.b16 %v26
    %v148 = vunpack.c.h.b16 %v26
    %v149 = vunpack.c.l.b16 %v27
    %v150 = vunpack.c.h.b16 %v27
    %v151 = vunpack.c.l.b16 %v28
    %v152 = vunpack.c.h.b16 %v28
    %v153 = vunpack.c.l.b16 %v29
    %v154 = vunpack.c.h.b16 %v29
    %v155 = vunpack.c.l.b16 %v30
    %v156 = vunpack.c.h.b16 %v30
    %v157 = vunpack.c.l.b16 %v31
    %v158 = vunpack.c.h.b16 %v31
    %v159 = vunpack.c.l.b16 %v32
    %v160 = vunpack.c.h.b16 %v32
    %v161 = vunpack.c.l.b16 %v33
    %v162 = vunpack.c.h.b16 %v33
    %v163 = vunpack.c.l.b16 %v34
    %v164 = vunpack.c.h.b16 %v34
    %v165 = vunpack.c.l.b16 %v35
    %v166 = vunpack.c.h.b16 %v35
    %v167 = vunpack.c.l.b16 %v36
    %v168 = vunpack.c.h.b16 %v36
    %v169 = vunpack.c.l.b16 %v37
    %v170 = vunpack.c.h.b16 %v37
    %v171 = vunpack.c.l.b16 %v38
    %v172 = vunpack.c.h.b16 %v38
    %v173 = vunpack.c.l.b16 %v39
    %v174 = vunpack.c.h.b16 %v39
    %v175 = vunpack.c.l.b16 %v40
    %v176 = vunpack.c.h.b16 %v40
    %v177 = vunpack.c.l.b16 %v41
    %v178 = vunpack.c.h.b16 %v41
    %v179 = vunpack.c.l.b16 %v42
    %v180 = vunpack.c.h.b16 %v42
    %v181 = vunpack.c.l.b16 %v43
    %v182 = vunpack.c.h.b16 %v43
    %v183 = vunpack.c.l.b16 %v44
    %v184 = vunpack.c.h.b16 %v44
    %v185 = vunpack.c.l.b16 %v45
    %v186 = vunpack.c.h.b16 %v45
    %v187 = vunpack.c.l.b16 %v46
    %v188 = vunpack.c.h.b16 %v46
    %v189 = vunpack.c.l.b16 %v47
    %v190 = vunpack.c.h.b16 %v47
    %v191 = vunpack.c.l.b16 %v48
    %v192 = vunpack.c.h.b16 %v48
    %v193 = vunpack.c.l.b16 %v49
    %v194 = vunpack.c.h.b16 %v49
    %v195 = vunpack.c.l.b16 %v50
    %v196 = vunpack.c.h.b16 %v50
    %v197 = vunpack.c.l.b16 %v51
    %v198 = vunpack.c.h.b16 %v51
    %v199 = vunpack.c.l.b16 %v52
    %v200 = vunpack.c.h.b16 %v52
    %v201 = vunpack.c.l.b16 %v53
    %v202 = vunpack.c.h.b16 %v53
    %v203 = vunpack.c.l.b16 %v54
    %v204 = vunpack.c.h.b16 %v54
    %v205 = vunpack.c.l.b16 %v55
    %v206 = vunpack.c.h.b16 %v55
    %v207 = vunpack.c.l.b16 %v56
    %v208 = vunpack.c.h.b16 %v56
    %v209 = vunpack.c.l.b16 %v57
    %v210 = vunpack.c.h.b16 %v57
    %v211 = vunpack.c.l.b16 %v58
    %v212 = vunpack.c.h.b16 %v58
    %v213 = vunpack.c.l.b16 %v59
    %v214 = vunpack.c.h.b16 %v59
    %v215 = vunpack.c.l.b16 %v60
    %v216 = vunpack.c.h.b16 %v60
    %v217 = vunpack.c.l.b16 %v61
    %v218 = vunpack.c.h.b16 %v61
    %v219 = vpack.c.b16 %v147, %v141
    %v220 = vpack.c.b16 %v148, %v142
    %v221 = vpack.c.b16 %v149, %v143
    %v222 = vpack.c.b16 %v150, %v144
    %v223 = vpack.c.b16 %v151, %v145
    %v224 = vpack.c.b16 %v152, %v146
    %v225 = vpack.c.b16 %v159, %v153
    %v226 = vpack.c.b16 %v160, %v154
    %v227 = vpack.c.b16 %v161, %v155
    %v228 = vpack.c.b16 %v162, %v156
    %v229 = vpack.c.b16 %v163, %v157
    %v230 = vpack.c.b16 %v164, %v158
    %v231 = vpack.c.b16 %v171, %v165
    %v232 = vpack.c.b16 %v172, %v166
    %v233 = vpack.c.b16 %v173, %v167
    %v234 = vpack.c.b16 %v174, %v168
    %v235 = vpack.c.b16 %v175, %v169
    %v236 = vpack.c.b16 %v176, %v170
    %v237 = vpack.c.b16 %v183, %v177
    %v238 = vpack.c.b16 %v184, %v178
    %v239 = vpack.c.b16 %v185, %v179
    %v240 = vpack.c.b16 %v186, %v180
    %v241 = vpack.c.b16 %v187, %v181
    %v242 = vpack.c.b16 %v188, %v182
    %v243 = vpack.c.b16 %v195, %v189
    %v244 = vpack.c.b16 %v196, %v190
    %v245 = vpack.c.b16 %v197, %v191
    %v246 = vpack.c.b16 %v198, %v192
    %v247 = vpack.c.b16 %v199, %v193
    %v248 = vpack.c.b16 %v200, %v194
    %v249 = vpack.c.b16 %v207, %v201
    %v250 = vpack.c.b16 %v208, %v202
    %v251 = vpack.c.b16 %v209, %v203
    %v252 = vpack.c.b16 %v210, %v204
    %v253 = vpack.c.b16 %v211, %v205
    %v254 = vpack.c.b16 %v212, %v206
    %v255 = vpack.c.b16 %v213, %v213
    %v256 = vpack.c.b16 %v214, %v214
    %v257 = vpack.c.b16 %v215, %v215
    %v258 = vpack.c.b16 %v216, %v216
    %v259 = vpack.c.b16 %v217, %v217
    %v260 = vpack.c.b16 %v218, %v218
    %vm297 = vcmask 842752
    %v299 = vsel %vm297, %v101, 0
    %vm301 = vcmask 1042432
    %vm302 = vcmask 1043456
    %v303 = vsel %vm301, 4294967295, 65535
    %v304 = vsel %vm302, %v303, 0
    %v306 = vand.u32 %v255, %v304
    %v309 = vand.u32 %v256, %v304
    %v312 = vand.u32 %v257, %v304
    %v315 = vand.u32 %v258, %v304
    %v318 = vand.u32 %v259, %v304
    %v321 = vand.u32 %v260, %v304
    %323 = vmatprep.subr.bf16.mxu0 %v220
    %324 = vmatpush1.bf16.msra.mxu0 %v219
    %325 = vmatprep.subr.bf16.mxu0 %v226
    %326 = vmatpush1.bf16.msra.mxu0 %v225
    %327 = vmatprep.subr.bf16.mxu0 %v232
    %328 = vmatpush1.bf16.msra.mxu0 %v231
    %329 = vmatprep.subr.bf16.mxu0 %v238
    %330 = vmatpush1.bf16.msra.mxu0 %v237
    %331 = vmatprep.subr.bf16.mxu0 %v244
    %332 = vmatpush1.bf16.msra.mxu0 %v243
    %333 = vmatprep.subr.bf16.mxu0 %v250
    %334 = vmatpush1.bf16.msra.mxu0 %v249
    %335 = vmatprep.subr.bf16.mxu0 %v309
    %336 = vmatpush1.bf16.msra.mxu0 %v306
    %337 = vmatprep.subr.bf16.mxu0 0
    %338 = vmatpush1.bf16.msra.mxu0 0
    %339 = vmatprep.subr.bf16.mxu0 0
    %340 = vmatpush1.bf16.msra.mxu0 0
    %341 = vmatprep.subr.bf16.mxu0 0
    %342 = vmatpush1.bf16.msra.mxu0 0
    %343 = vmatprep.subr.bf16.mxu0 0
    %344 = vmatpush1.bf16.msra.mxu0 0
    %345 = vmatprep.subr.bf16.mxu0 0
    %346 = vmatpush1.bf16.msra.mxu0 0
    %347 = vmatprep.subr.bf16.mxu0 0
    %348 = vmatpush1.bf16.msra.mxu0 0
    %349 = vmatprep.subr.bf16.mxu0 0
    %350 = vmatpush1.bf16.msra.mxu0 0
    %351 = vmatprep.subr.bf16.mxu0 0
    %352 = vmatpush1.bf16.msra.mxu0 0
    %353 = vmatprep.subr.bf16.mxu0 0
    %354 = vmatpush1.bf16.msra.mxu0 0
    %355 = vmatprep.mubr.bf16.mxu0 0
    %356 = vmatmul.mubr.bf16.gmra.mrb[0].mxu0 %v299
    %v357 = vpop.f32.mrb[0].mxu0
    %v358 = vadd.f32 0.0, %v357
    %v359 = vpop.f32.mrb[0].mxu0
    %v360 = vadd.f32 0.0, %v359
    %v361 = vpop.f32.mrb[0].mxu0
    %v362 = vpop.f32.mrb[0].mxu0
    %363 = vdwg.mxu0
    %364 = vmatprep.subr.bf16.mxu0 %v222
    %365 = vmatpush1.bf16.msra.mxu0 %v221
    %366 = vmatprep.subr.bf16.mxu0 %v228
    %367 = vmatpush1.bf16.msra.mxu0 %v227
    %368 = vmatprep.subr.bf16.mxu0 %v234
    %369 = vmatpush1.bf16.msra.mxu0 %v233
    %370 = vmatprep.subr.bf16.mxu0 %v240
    %371 = vmatpush1.bf16.msra.mxu0 %v239
    %372 = vmatprep.subr.bf16.mxu0 %v246
    %373 = vmatpush1.bf16.msra.mxu0 %v245
    %374 = vmatprep.subr.bf16.mxu0 %v252
    %375 = vmatpush1.bf16.msra.mxu0 %v251
    %376 = vmatprep.subr.bf16.mxu0 %v315
    %377 = vmatpush1.bf16.msra.mxu0 %v312
    %378 = vmatprep.subr.bf16.mxu0 0
    %379 = vmatpush1.bf16.msra.mxu0 0
    %380 = vmatprep.subr.bf16.mxu0 0
    %381 = vmatpush1.bf16.msra.mxu0 0
    %382 = vmatprep.subr.bf16.mxu0 0
    %383 = vmatpush1.bf16.msra.mxu0 0
    %384 = vmatprep.subr.bf16.mxu0 0
    %385 = vmatpush1.bf16.msra.mxu0 0
    %386 = vmatprep.subr.bf16.mxu0 0
    %387 = vmatpush1.bf16.msra.mxu0 0
    %388 = vmatprep.subr.bf16.mxu0 0
    %389 = vmatpush1.bf16.msra.mxu0 0
    %390 = vmatprep.subr.bf16.mxu0 0
    %391 = vmatpush1.bf16.msra.mxu0 0
    %392 = vmatprep.subr.bf16.mxu0 0
    %393 = vmatpush1.bf16.msra.mxu0 0
    %394 = vmatprep.subr.bf16.mxu0 0
    %395 = vmatpush1.bf16.msra.mxu0 0
    %396 = vmatprep.mubr.bf16.mxu0 0
    %397 = vmatmul.mubr.bf16.gmra.mrb[0].mxu0 %v299
    %v398 = vpop.f32.mrb[0].mxu0
    %v399 = vadd.f32 0.0, %v398
    %v400 = vpop.f32.mrb[0].mxu0
    %v401 = vadd.f32 0.0, %v400
    %v402 = vpop.f32.mrb[0].mxu0
    %v403 = vpop.f32.mrb[0].mxu0
    %404 = vdwg.mxu0
    %405 = vmatprep.subr.bf16.mxu0 %v224
    %406 = vmatpush1.bf16.msra.mxu0 %v223
    %407 = vmatprep.subr.bf16.mxu0 %v230
    %408 = vmatpush1.bf16.msra.mxu0 %v229
    %409 = vmatprep.subr.bf16.mxu0 %v236
    %410 = vmatpush1.bf16.msra.mxu0 %v235
    %411 = vmatprep.subr.bf16.mxu0 %v242
    %412 = vmatpush1.bf16.msra.mxu0 %v241
    %413 = vmatprep.subr.bf16.mxu0 %v248
    %414 = vmatpush1.bf16.msra.mxu0 %v247
    %415 = vmatprep.subr.bf16.mxu0 %v254
    %416 = vmatpush1.bf16.msra.mxu0 %v253
    %417 = vmatprep.subr.bf16.mxu0 %v321
    %418 = vmatpush1.bf16.msra.mxu0 %v318
    %419 = vmatprep.subr.bf16.mxu0 0
    %420 = vmatpush1.bf16.msra.mxu0 0
    %421 = vmatprep.subr.bf16.mxu0 0
    %422 = vmatpush1.bf16.msra.mxu0 0
    %423 = vmatprep.subr.bf16.mxu0 0
    %424 = vmatpush1.bf16.msra.mxu0 0
    %425 = vmatprep.subr.bf16.mxu0 0
    %426 = vmatpush1.bf16.msra.mxu0 0
    %427 = vmatprep.subr.bf16.mxu0 0
    %428 = vmatpush1.bf16.msra.mxu0 0
    %429 = vmatprep.subr.bf16.mxu0 0
    %430 = vmatpush1.bf16.msra.mxu0 0
    %431 = vmatprep.subr.bf16.mxu0 0
    %432 = vmatpush1.bf16.msra.mxu0 0
    %433 = vmatprep.subr.bf16.mxu0 0
    %434 = vmatpush1.bf16.msra.mxu0 0
    %435 = vmatprep.subr.bf16.mxu0 0
    %436 = vmatpush1.bf16.msra.mxu0 0
    %437 = vmatprep.mubr.bf16.mxu0 0
    %438 = vmatmul.mubr.bf16.gmra.mrb[0].mxu0 %v299
    %v439 = vpop.f32.mrb[0].mxu0
    %v440 = vadd.f32 0.0, %v439
    %v441 = vpop.f32.mrb[0].mxu0
    %v442 = vadd.f32 0.0, %v441
    %v443 = vpop.f32.mrb[0].mxu0
    %v444 = vpop.f32.mrb[0].mxu0
    %445 = vdwg.mxu0
    %v485 = vunpack.c.l.b16 %v62
    %v486 = vunpack.c.h.b16 %v62
    %v487 = vunpack.c.l.b16 %v63
    %v488 = vunpack.c.h.b16 %v63
    %v489 = vunpack.c.l.b16 %v64
    %v490 = vunpack.c.h.b16 %v64
    %v491 = vunpack.c.l.b16 %v65
    %v492 = vunpack.c.h.b16 %v65
    %v493 = vunpack.c.l.b16 %v66
    %v494 = vunpack.c.h.b16 %v66
    %v495 = vunpack.c.l.b16 %v67
    %v496 = vunpack.c.h.b16 %v67
    %v497 = vunpack.c.l.b16 %v68
    %v498 = vunpack.c.h.b16 %v68
    %v499 = vunpack.c.l.b16 %v69
    %v500 = vunpack.c.h.b16 %v69
    %v501 = vunpack.c.l.b16 %v70
    %v502 = vunpack.c.h.b16 %v70
    %v503 = vunpack.c.l.b16 %v71
    %v504 = vunpack.c.h.b16 %v71
    %v505 = vunpack.c.l.b16 %v72
    %v506 = vunpack.c.h.b16 %v72
    %v507 = vunpack.c.l.b16 %v73
    %v508 = vunpack.c.h.b16 %v73
    %v509 = vunpack.c.l.b16 %v74
    %v510 = vunpack.c.h.b16 %v74
    %v511 = vunpack.c.l.b16 %v75
    %v512 = vunpack.c.h.b16 %v75
    %v513 = vunpack.c.l.b16 %v76
    %v514 = vunpack.c.h.b16 %v76
    %v515 = vunpack.c.l.b16 %v77
    %v516 = vunpack.c.h.b16 %v77
    %v517 = vunpack.c.l.b16 %v78
    %v518 = vunpack.c.h.b16 %v78
    %v519 = vunpack.c.l.b16 %v79
    %v520 = vunpack.c.h.b16 %v79
    %v521 = vunpack.c.l.b16 %v80
    %v522 = vunpack.c.h.b16 %v80
    %v523 = vunpack.c.l.b16 %v81
    %v524 = vunpack.c.h.b16 %v81
    %v525 = vunpack.c.l.b16 %v82
    %v526 = vunpack.c.h.b16 %v82
    %v527 = vunpack.c.l.b16 %v83
    %v528 = vunpack.c.h.b16 %v83
    %v529 = vunpack.c.l.b16 %v84
    %v530 = vunpack.c.h.b16 %v84
    %v531 = vunpack.c.l.b16 %v85
    %v532 = vunpack.c.h.b16 %v85
    %v533 = vunpack.c.l.b16 %v86
    %v534 = vunpack.c.h.b16 %v86
    %v535 = vunpack.c.l.b16 %v87
    %v536 = vunpack.c.h.b16 %v87
    %v537 = vunpack.c.l.b16 %v88
    %v538 = vunpack.c.h.b16 %v88
    %v539 = vunpack.c.l.b16 %v89
    %v540 = vunpack.c.h.b16 %v89
    %v541 = vunpack.c.l.b16 %v90
    %v542 = vunpack.c.h.b16 %v90
    %v543 = vunpack.c.l.b16 %v91
    %v544 = vunpack.c.h.b16 %v91
    %v545 = vunpack.c.l.b16 %v92
    %v546 = vunpack.c.h.b16 %v92
    %v547 = vunpack.c.l.b16 %v93
    %v548 = vunpack.c.h.b16 %v93
    %v549 = vunpack.c.l.b16 %v94
    %v550 = vunpack.c.h.b16 %v94
    %v551 = vunpack.c.l.b16 %v95
    %v552 = vunpack.c.h.b16 %v95
    %v553 = vunpack.c.l.b16 %v96
    %v554 = vunpack.c.h.b16 %v96
    %v555 = vunpack.c.l.b16 %v97
    %v556 = vunpack.c.h.b16 %v97
    %v557 = vunpack.c.l.b16 %v98
    %v558 = vunpack.c.h.b16 %v98
    %v559 = vunpack.c.l.b16 %v99
    %v560 = vunpack.c.h.b16 %v99
    %v561 = vunpack.c.l.b16 %v100
    %v562 = vunpack.c.h.b16 %v100
    %v563 = vpack.c.b16 %v491, %v485
    %v564 = vpack.c.b16 %v492, %v486
    %v565 = vpack.c.b16 %v493, %v487
    %v566 = vpack.c.b16 %v494, %v488
    %v567 = vpack.c.b16 %v495, %v489
    %v568 = vpack.c.b16 %v496, %v490
    %v569 = vpack.c.b16 %v503, %v497
    %v570 = vpack.c.b16 %v504, %v498
    %v571 = vpack.c.b16 %v505, %v499
    %v572 = vpack.c.b16 %v506, %v500
    %v573 = vpack.c.b16 %v507, %v501
    %v574 = vpack.c.b16 %v508, %v502
    %v575 = vpack.c.b16 %v515, %v509
    %v576 = vpack.c.b16 %v516, %v510
    %v577 = vpack.c.b16 %v517, %v511
    %v578 = vpack.c.b16 %v518, %v512
    %v579 = vpack.c.b16 %v519, %v513
    %v580 = vpack.c.b16 %v520, %v514
    %v581 = vpack.c.b16 %v527, %v521
    %v582 = vpack.c.b16 %v528, %v522
    %v583 = vpack.c.b16 %v529, %v523
    %v584 = vpack.c.b16 %v530, %v524
    %v585 = vpack.c.b16 %v531, %v525
    %v586 = vpack.c.b16 %v532, %v526
    %v587 = vpack.c.b16 %v539, %v533
    %v588 = vpack.c.b16 %v540, %v534
    %v589 = vpack.c.b16 %v541, %v535
    %v590 = vpack.c.b16 %v542, %v536
    %v591 = vpack.c.b16 %v543, %v537
    %v592 = vpack.c.b16 %v544, %v538
    %v593 = vpack.c.b16 %v551, %v545
    %v594 = vpack.c.b16 %v552, %v546
    %v595 = vpack.c.b16 %v553, %v547
    %v596 = vpack.c.b16 %v554, %v548
    %v597 = vpack.c.b16 %v555, %v549
    %v598 = vpack.c.b16 %v556, %v550
    %v599 = vpack.c.b16 %v557, %v557
    %v600 = vpack.c.b16 %v558, %v558
    %v601 = vpack.c.b16 %v559, %v559
    %v602 = vpack.c.b16 %v560, %v560
    %v603 = vpack.c.b16 %v561, %v561
    %v604 = vpack.c.b16 %v562, %v562
    %v642 = vand.u32 %v599, %v304
    %v645 = vand.u32 %v600, %v304
    %v648 = vand.u32 %v601, %v304
    %v651 = vand.u32 %v602, %v304
    %v654 = vand.u32 %v603, %v304
    %v657 = vand.u32 %v604, %v304
    %659 = vmatprep.subr.bf16.mxu0 %v564
    %660 = vmatpush1.bf16.msra.mxu0 %v563
    %661 = vmatprep.subr.bf16.mxu0 %v570
    %662 = vmatpush1.bf16.msra.mxu0 %v569
    %663 = vmatprep.subr.bf16.mxu0 %v576
    %664 = vmatpush1.bf16.msra.mxu0 %v575
    %665 = vmatprep.subr.bf16.mxu0 %v582
    %666 = vmatpush1.bf16.msra.mxu0 %v581
    %667 = vmatprep.subr.bf16.mxu0 %v588
    %668 = vmatpush1.bf16.msra.mxu0 %v587
    %669 = vmatprep.subr.bf16.mxu0 %v594
    %670 = vmatpush1.bf16.msra.mxu0 %v593
    %671 = vmatprep.subr.bf16.mxu0 %v645
    %672 = vmatpush1.bf16.msra.mxu0 %v642
    %673 = vmatprep.subr.bf16.mxu0 0
    %674 = vmatpush1.bf16.msra.mxu0 0
    %675 = vmatprep.subr.bf16.mxu0 0
    %676 = vmatpush1.bf16.msra.mxu0 0
    %677 = vmatprep.subr.bf16.mxu0 0
    %678 = vmatpush1.bf16.msra.mxu0 0
    %679 = vmatprep.subr.bf16.mxu0 0
    %680 = vmatpush1.bf16.msra.mxu0 0
    %681 = vmatprep.subr.bf16.mxu0 0
    %682 = vmatpush1.bf16.msra.mxu0 0
    %683 = vmatprep.subr.bf16.mxu0 0
    %684 = vmatpush1.bf16.msra.mxu0 0
    %685 = vmatprep.subr.bf16.mxu0 0
    %686 = vmatpush1.bf16.msra.mxu0 0
    %687 = vmatprep.subr.bf16.mxu0 0
    %688 = vmatpush1.bf16.msra.mxu0 0
    %689 = vmatprep.subr.bf16.mxu0 0
    %690 = vmatpush1.bf16.msra.mxu0 0
    %691 = vmatprep.mubr.bf16.mxu0 0
    %692 = vmatmul.mubr.bf16.gmra.mrb[0].mxu0 %v299
    %v693 = vpop.f32.mrb[0].mxu0
    %v694 = vadd.f32 0.0, %v693
    %v695 = vpop.f32.mrb[0].mxu0
    %v696 = vadd.f32 0.0, %v695
    %v697 = vpop.f32.mrb[0].mxu0
    %v698 = vpop.f32.mrb[0].mxu0
    %699 = vdwg.mxu0
    %700 = vmatprep.subr.bf16.mxu0 %v566
    %701 = vmatpush1.bf16.msra.mxu0 %v565
    %702 = vmatprep.subr.bf16.mxu0 %v572
    %703 = vmatpush1.bf16.msra.mxu0 %v571
    %704 = vmatprep.subr.bf16.mxu0 %v578
    %705 = vmatpush1.bf16.msra.mxu0 %v577
    %706 = vmatprep.subr.bf16.mxu0 %v584
    %707 = vmatpush1.bf16.msra.mxu0 %v583
    %708 = vmatprep.subr.bf16.mxu0 %v590
    %709 = vmatpush1.bf16.msra.mxu0 %v589
    %710 = vmatprep.subr.bf16.mxu0 %v596
    %711 = vmatpush1.bf16.msra.mxu0 %v595
    %712 = vmatprep.subr.bf16.mxu0 %v651
    %713 = vmatpush1.bf16.msra.mxu0 %v648
    %714 = vmatprep.subr.bf16.mxu0 0
    %715 = vmatpush1.bf16.msra.mxu0 0
    %716 = vmatprep.subr.bf16.mxu0 0
    %717 = vmatpush1.bf16.msra.mxu0 0
    %718 = vmatprep.subr.bf16.mxu0 0
    %719 = vmatpush1.bf16.msra.mxu0 0
    %720 = vmatprep.subr.bf16.mxu0 0
    %721 = vmatpush1.bf16.msra.mxu0 0
    %722 = vmatprep.subr.bf16.mxu0 0
    %723 = vmatpush1.bf16.msra.mxu0 0
    %724 = vmatprep.subr.bf16.mxu0 0
    %725 = vmatpush1.bf16.msra.mxu0 0
    %726 = vmatprep.subr.bf16.mxu0 0
    %727 = vmatpush1.bf16.msra.mxu0 0
    %728 = vmatprep.subr.bf16.mxu0 0
    %729 = vmatpush1.bf16.msra.mxu0 0
    %730 = vmatprep.subr.bf16.mxu0 0
    %731 = vmatpush1.bf16.msra.mxu0 0
    %732 = vmatprep.mubr.bf16.mxu0 0
    %733 = vmatmul.mubr.bf16.gmra.mrb[0].mxu0 %v299
    %v734 = vpop.f32.mrb[0].mxu0
    %v735 = vadd.f32 0.0, %v734
    %v736 = vpop.f32.mrb[0].mxu0
    %v737 = vadd.f32 0.0, %v736
    %v738 = vpop.f32.mrb[0].mxu0
    %v739 = vpop.f32.mrb[0].mxu0
    %740 = vdwg.mxu0
    %741 = vmatprep.subr.bf16.mxu0 %v568
    %742 = vmatpush1.bf16.msra.mxu0 %v567
    %743 = vmatprep.subr.bf16.mxu0 %v574
    %744 = vmatpush1.bf16.msra.mxu0 %v573
    %745 = vmatprep.subr.bf16.mxu0 %v580
    %746 = vmatpush1.bf16.msra.mxu0 %v579
    %747 = vmatprep.subr.bf16.mxu0 %v586
    %748 = vmatpush1.bf16.msra.mxu0 %v585
    %749 = vmatprep.subr.bf16.mxu0 %v592
    %750 = vmatpush1.bf16.msra.mxu0 %v591
    %751 = vmatprep.subr.bf16.mxu0 %v598
    %752 = vmatpush1.bf16.msra.mxu0 %v597
    %753 = vmatprep.subr.bf16.mxu0 %v657
    %754 = vmatpush1.bf16.msra.mxu0 %v654
    %755 = vmatprep.subr.bf16.mxu0 0
    %756 = vmatpush1.bf16.msra.mxu0 0
    %757 = vmatprep.subr.bf16.mxu0 0
    %758 = vmatpush1.bf16.msra.mxu0 0
    %759 = vmatprep.subr.bf16.mxu0 0
    %760 = vmatpush1.bf16.msra.mxu0 0
    %761 = vmatprep.subr.bf16.mxu0 0
    %762 = vmatpush1.bf16.msra.mxu0 0
    %763 = vmatprep.subr.bf16.mxu0 0
    %764 = vmatpush1.bf16.msra.mxu0 0
    %765 = vmatprep.subr.bf16.mxu0 0
    %766 = vmatpush1.bf16.msra.mxu0 0
    %767 = vmatprep.subr.bf16.mxu0 0
    %768 = vmatpush1.bf16.msra.mxu0 0
    %769 = vmatprep.subr.bf16.mxu0 0
    %770 = vmatpush1.bf16.msra.mxu0 0
    %771 = vmatprep.subr.bf16.mxu0 0
    %772 = vmatpush1.bf16.msra.mxu0 0
    %773 = vmatprep.mubr.bf16.mxu0 0
    %774 = vmatmul.mubr.bf16.gmra.mrb[0].mxu0 %v299
    %v775 = vpop.f32.mrb[0].mxu0
    %v776 = vadd.f32 0.0, %v775
    %v777 = vpop.f32.mrb[0].mxu0
    %v778 = vadd.f32 0.0, %v777
    %v779 = vpop.f32.mrb[0].mxu0
    %v780 = vpop.f32.mrb[0].mxu0
    %781 = vdwg.mxu0
    %s782 = sld [smem:[#allocation2]]
    %v783 = vstv %s782
    %v784 = vadd.f32 %v358, %v783
    %v785 = vadd.f32 %v360, %v783
    %v786 = vadd.f32 %v399, %v783
    %v787 = vadd.f32 %v401, %v783
    %v788 = vadd.f32 %v440, %v783
    %v789 = vadd.f32 %v442, %v783
    %v790 = vadd.f32 %v694, %v783
    %v791 = vadd.f32 %v696, %v783
    %v792 = vadd.f32 %v735, %v783
    %v793 = vadd.f32 %v737, %v783
    %v794 = vadd.f32 %v776, %v783
    %v795 = vadd.f32 %v778, %v783
    %vm796 = vcmp.ge.f32.partialorder %v784, 0.0
    %vm797 = vcmp.ge.f32.partialorder %v785, 0.0
    %vm798 = vcmp.ge.f32.partialorder %v786, 0.0
    %vm799 = vcmp.ge.f32.partialorder %v787, 0.0
    %vm800 = vcmp.ge.f32.partialorder %v788, 0.0
    %vm801 = vcmp.ge.f32.partialorder %v789, 0.0
    %vm802 = vcmp.ge.f32.partialorder %v790, 0.0
    %vm803 = vcmp.ge.f32.partialorder %v791, 0.0
    %vm804 = vcmp.ge.f32.partialorder %v792, 0.0
    %vm805 = vcmp.ge.f32.partialorder %v793, 0.0
    %vm806 = vcmp.ge.f32.partialorder %v794, 0.0
    %vm807 = vcmp.ge.f32.partialorder %v795, 0.0
    %v808 = vmul.f32 %v784, 0.01
    %v809 = vmul.f32 %v785, 0.01
    %v810 = vmul.f32 %v786, 0.01
    %v811 = vmul.f32 %v787, 0.01
    %v812 = vmul.f32 %v788, 0.01
    %v813 = vmul.f32 %v789, 0.01
    %v814 = vmul.f32 %v790, 0.01
    %v815 = vmul.f32 %v791, 0.01
    %v816 = vmul.f32 %v792, 0.01
    %v817 = vmul.f32 %v793, 0.01
    %v818 = vmul.f32 %v794, 0.01
    %v819 = vmul.f32 %v795, 0.01
    %v820 = vsel %vm796, %v784, %v808
    %v821 = vsel %vm797, %v785, %v809
    %v822 = vsel %vm798, %v786, %v810
    %v823 = vsel %vm799, %v787, %v811
    %v824 = vsel %vm800, %v788, %v812
    %v825 = vsel %vm801, %v789, %v813
    %v826 = vsel %vm802, %v790, %v814
    %v827 = vsel %vm803, %v791, %v815
    %v828 = vsel %vm804, %v792, %v816
    %v829 = vsel %vm805, %v793, %v817
    %v830 = vsel %vm806, %v794, %v818
    %v831 = vsel %vm807, %v795, %v819
    %v832 = vld [vmem:[%s3] sm:$0xff]
    %v833 = vld [vmem:[%s3 + $0x8] sm:$0xff]
    %v834 = vld [vmem:[%s3 + $0x10] sm:$0xff]
    %v835 = vld [vmem:[%s3 + $0x18] sm:$0xff]
    %v836 = vld [vmem:[%s3 + $0x20] sm:$0xff]
    %v837 = vld [vmem:[%s3 + $0x28] sm:$0xff]
    %v838 = vld [vmem:[%s3 + $0x30] sm:$0xff]
    %v839 = vld [vmem:[%s3 + $0x38] sm:$0xff]
    %v840 = vld [vmem:[%s3 + $0x40] sm:$0xff]
    %v841 = vld [vmem:[%s3 + $0x48] sm:$0xff]
    %v842 = vld [vmem:[%s3 + $0x50] sm:$0xff]
    %v843 = vld [vmem:[%s3 + $0x58] sm:$0xff]
    %v844 = vld [vmem:[%s3 + $0x60] sm:$0xff]
    %v845 = vld [vmem:[%s3 + $0x68] sm:$0xff]
    %v846 = vld [vmem:[%s3 + $0x70] sm:$0xff]
    %v847 = vld [vmem:[%s3 + $0x78] sm:$0xff]
    %v848 = vld [vmem:[%s3 + $0x80] sm:$0xff]
    %v849 = vld [vmem:[%s3 + $0x88] sm:$0xff]
    %v850 = vld [vmem:[%s3 + $0x90] sm:$0xff]
    %v851 = vld [vmem:[%s3 + $0x98] sm:$0xff]
    %v852 = vld [vmem:[%s3 + $0xa0] sm:$0xff]
    %v853 = vld [vmem:[%s3 + $0xa8] sm:$0xff]
    %v854 = vld [vmem:[%s3 + $0xb0] sm:$0xff]
    %v855 = vld [vmem:[%s3 + $0xb8] sm:$0xff]
    %v856 = vld [vmem:[%s3 + $0xc0] sm:$0xff]
    %v857 = vld [vmem:[%s3 + $0xc8] sm:$0xff]
    %v858 = vld [vmem:[%s3 + $0xd0] sm:$0xff]
    %v859 = vld [vmem:[%s3 + $0xd8] sm:$0xff]
    %v860 = vld [vmem:[%s3 + $0xe0] sm:$0xff]
    %v861 = vld [vmem:[%s3 + $0xe8] sm:$0xff]
    %v862 = vld [vmem:[%s3 + $0xf0] sm:$0xff]
    %v863 = vld [vmem:[%s3 + $0xf8] sm:$0xff]
    %v864 = vld [vmem:[%s3 + $0x100] sm:$0xff]
    %v865 = vld [vmem:[%s3 + $0x108] sm:$0xff]
    %v866 = vld [vmem:[%s3 + $0x110] sm:$0xff]
    %v867 = vld [vmem:[%s3 + $0x118] sm:$0xff]
    %v868 = vld [vmem:[%s3 + $0x120] sm:$0xff]
    %v869 = vld [vmem:[%s3 + $0x128] sm:$0xff]
    %v870 = vld [vmem:[%s3 + $0x130] sm:$0xff]
    %v871 = vld [vmem:[%s3 + $0x138] sm:$0xff]
    %v872 = vld [vmem:[%s3 + $0x140] sm:$0xff]
    %v873 = vld [vmem:[%s3 + $0x148] sm:$0xff]
    %v874 = vld [vmem:[%s3 + $0x150] sm:$0xff]
    %v875 = vld [vmem:[%s3 + $0x158] sm:$0xff]
    %v876 = vld [vmem:[%s3 + $0x160] sm:$0xff]
    %v877 = vld [vmem:[%s3 + $0x168] sm:$0xff]
    %v878 = vld [vmem:[%s3 + $0x170] sm:$0xff]
    %v879 = vld [vmem:[%s3 + $0x178] sm:$0xff]
    %v880 = vld [vmem:[%s3 + $0x180] sm:$0xff]
    %v881 = vld [vmem:[%s3 + $0x188] sm:$0xff]
    %v882 = vld [vmem:[%s3 + $0x190] sm:$0xff]
    %v883 = vld [vmem:[%s3 + $0x198] sm:$0xff]
    %v884 = vld [vmem:[%s3 + $0x1a0] sm:$0xff]
    %v885 = vld [vmem:[%s3 + $0x1a8] sm:$0xff]
    %v886 = vld [vmem:[%s3 + $0x1b0] sm:$0xff]
    %v887 = vld [vmem:[%s3 + $0x1b8] sm:$0xff]
    %v888 = vld [vmem:[%s3 + $0x1c0] sm:$0xff]
    %v889 = vld [vmem:[%s3 + $0x1c8] sm:$0xff]
    %v890 = vld [vmem:[%s3 + $0x1d0] sm:$0xff]
    %v891 = vld [vmem:[%s3 + $0x1d8] sm:$0xff]
    %v892 = vld [vmem:[%s3 + $0x1e0] sm:$0xff]
    %v893 = vld [vmem:[%s3 + $0x1e8] sm:$0xff]
    %v894 = vld [vmem:[%s3 + $0x1f0] sm:$0xff]
    %v895 = vld [vmem:[%s3 + $0x1f8] sm:$0xff]
    %v896 = vld [vmem:[%s3 + $0x200] sm:$0xff]
    %v897 = vld [vmem:[%s3 + $0x208] sm:$0xff]
    %v898 = vld [vmem:[%s3 + $0x210] sm:$0xff]
    %v899 = vld [vmem:[%s3 + $0x218] sm:$0xff]
    %v900 = vld [vmem:[%s3 + $0x220] sm:$0xff]
    %v901 = vld [vmem:[%s3 + $0x228] sm:$0xff]
    %v902 = vld [vmem:[%s3 + $0x230] sm:$0xff]
    %v903 = vld [vmem:[%s3 + $0x238] sm:$0xff]
    %v904 = vld [vmem:[%s3 + $0x240] sm:$0xff]
    %v905 = vld [vmem:[%s3 + $0x248] sm:$0xff]
    %v906 = vld [vmem:[%s3 + $0x250] sm:$0xff]
    %v907 = vld [vmem:[%s3 + $0x258] sm:$0xff]
    %v908 = vld [vmem:[%s3 + $0x260] sm:$0xff]
    %v909 = vld [vmem:[%s3 + $0x268] sm:$0xff]
    %v910 = vld [vmem:[%s3 + $0x270] sm:$0xff]
    %v911 = vld [vmem:[%s3 + $0x278] sm:$0xff]
    %v912 = vld [vmem:[%s3 + $0x280] sm:$0xff]
    %v913 = vld [vmem:[%s3 + $0x288] sm:$0xff]
    %v914 = vld [vmem:[%s3 + $0x290] sm:$0xff]
    %v915 = vld [vmem:[%s3 + $0x298] sm:$0xff]
    %v916 = vld [vmem:[%s3 + $0x2a0] sm:$0xff]
    %v917 = vld [vmem:[%s3 + $0x2a8] sm:$0xff]
    %v918 = vld [vmem:[%s3 + $0x2b0] sm:$0xff]
    %v919 = vld [vmem:[%s3 + $0x2b8] sm:$0xff]
    %v920 = vld [vmem:[%s3 + $0x2c0] sm:$0xff]
    %v921 = vld [vmem:[%s3 + $0x2c8] sm:$0xff]
    %v922 = vld [vmem:[%s3 + $0x2d0] sm:$0xff]
    %v923 = vld [vmem:[%s3 + $0x2d8] sm:$0xff]
    %v924 = vld [vmem:[%s3 + $0x2e0] sm:$0xff]
    %v925 = vld [vmem:[%s3 + $0x2e8] sm:$0xff]
    %v926 = vld [vmem:[%s3 + $0x2f0] sm:$0xff]
    %v927 = vld [vmem:[%s3 + $0x2f8] sm:$0xff]
    %v928 = vld [vmem:[%s4] sm:$0x1]
    %v930 = vlaneseq
    %v931 = vshrl.u32 %v930, 7
    %v932 = vsub.s32 0, %v931
    %v933 = vrot.slane %v928, %v932
    %v947 = vrot.slane %v826, 7
    %vm948 = vcmask 1041409
    %v949 = vsel %vm948, %v947, %v820
    %v950 = vrot.slane %v827, 7
    %v951 = vsel %vm948, %v950, %v821
    %v952 = vrot.slane %v828, 7
    %v953 = vsel %vm948, %v952, %v822
    %v954 = vrot.slane %v829, 7
    %v955 = vsel %vm948, %v954, %v823
    %v956 = vrot.slane %v830, 7
    %v957 = vsel %vm948, %v956, %v824
    %v958 = vrot.slane %v831, 7
    %v959 = vsel %vm948, %v958, %v825
    %966 = vmatprep.subr.mxu0 0.0
    %967 = vmatpush1.msra.mxu0 %v832
    %968 = vmatprep.subr.mxu0 0.0
    %969 = vmatpush1.msra.mxu0 %v833
    %970 = vmatprep.subr.mxu0 0.0
    %971 = vmatpush1.msra.mxu0 %v834
    %972 = vmatprep.subr.mxu0 0.0
    %973 = vmatpush1.msra.mxu0 %v835
    %974 = vmatprep.subr.mxu0 0.0
    %975 = vmatpush1.msra.mxu0 %v836
    %976 = vmatprep.subr.mxu0 0.0
    %977 = vmatpush1.msra.mxu0 %v837
    %978 = vmatprep.subr.mxu0 0.0
    %979 = vmatpush1.msra.mxu0 %v838
    %980 = vmatprep.subr.mxu0 0.0
    %981 = vmatpush1.msra.mxu0 %v839
    %982 = vmatprep.subr.mxu0 0.0
    %983 = vmatpush1.msra.mxu0 %v840
    %984 = vmatprep.subr.mxu0 0.0
    %985 = vmatpush1.msra.mxu0 %v841
    %986 = vmatprep.subr.mxu0 0.0
    %987 = vmatpush1.msra.mxu0 %v842
    %988 = vmatprep.subr.mxu0 0.0
    %989 = vmatpush1.msra.mxu0 %v843
    %990 = vmatprep.subr.mxu0 0.0
    %991 = vmatpush1.msra.mxu0 %v844
    %992 = vmatprep.subr.mxu0 0.0
    %993 = vmatpush1.msra.mxu0 %v845
    %994 = vmatprep.subr.mxu0 0.0
    %995 = vmatpush1.msra.mxu0 %v846
    %996 = vmatprep.subr.mxu0 0.0
    %997 = vmatpush1.msra.mxu0 %v847
    %998 = vmatprep.subr.mxu0 0.0
    %999 = vmatpush1.msra.mxu0 %v848
    %1000 = vmatprep.subr.mxu0 0.0
    %1001 = vmatpush1.msra.mxu0 %v849
    %1002 = vmatprep.subr.mxu0 0.0
    %1003 = vmatpush1.msra.mxu0 %v850
    %1004 = vmatprep.subr.mxu0 0.0
    %1005 = vmatpush1.msra.mxu0 %v851
    %1006 = vmatprep.subr.mxu0 0.0
    %1007 = vmatpush1.msra.mxu0 %v852
    %1008 = vmatprep.subr.mxu0 0.0
    %1009 = vmatpush1.msra.mxu0 %v853
    %1010 = vmatprep.subr.mxu0 0.0
    %1011 = vmatpush1.msra.mxu0 %v854
    %1012 = vmatprep.subr.mxu0 0.0
    %1013 = vmatpush1.msra.mxu0 %v855
    %1014 = vmatprep.subr.mxu0 0.0
    %1015 = vmatpush1.msra.mxu0 %v856
    %1016 = vmatprep.subr.mxu0 0.0
    %1017 = vmatpush1.msra.mxu0 %v857
    %1018 = vmatprep.subr.mxu0 0.0
    %1019 = vmatpush1.msra.mxu0 %v858
    %1020 = vmatprep.subr.mxu0 0.0
    %1021 = vmatpush1.msra.mxu0 %v859
    %1022 = vmatprep.subr.mxu0 0.0
    %1023 = vmatpush1.msra.mxu0 %v860
    %1024 = vmatprep.subr.mxu0 0.0
    %1025 = vmatpush1.msra.mxu0 %v861
    %1026 = vmatprep.subr.mxu0 0.0
    %1027 = vmatpush1.msra.mxu0 %v862
    %1028 = vmatprep.subr.mxu0 0.0
    %1029 = vmatpush1.msra.mxu0 %v863
    %1030 = vmatprep.mubr.f32.mxu0 %v951
    %1031 = vmatmul.mubr.f32.gmra.mrb[0].mxu0 %v949
    %v1032 = vpop.f32.mrb[0].mxu0
    %v1033 = vadd.f32 %v933, %v1032
    %v1034 = vpop.f32.mrb[0].mxu0
    %1035 = vdwg.mxu0
    %1036 = vmatprep.subr.mxu0 0.0
    %1037 = vmatpush1.msra.mxu0 %v864
    %1038 = vmatprep.subr.mxu0 0.0
    %1039 = vmatpush1.msra.mxu0 %v865
    %1040 = vmatprep.subr.mxu0 0.0
    %1041 = vmatpush1.msra.mxu0 %v866
    %1042 = vmatprep.subr.mxu0 0.0
    %1043 = vmatpush1.msra.mxu0 %v867
    %1044 = vmatprep.subr.mxu0 0.0
    %1045 = vmatpush1.msra.mxu0 %v868
    %1046 = vmatprep.subr.mxu0 0.0
    %1047 = vmatpush1.msra.mxu0 %v869
    %1048 = vmatprep.subr.mxu0 0.0
    %1049 = vmatpush1.msra.mxu0 %v870
    %1050 = vmatprep.subr.mxu0 0.0
    %1051 = vmatpush1.msra.mxu0 %v871
    %1052 = vmatprep.subr.mxu0 0.0
    %1053 = vmatpush1.msra.mxu0 %v872
    %1054 = vmatprep.subr.mxu0 0.0
    %1055 = vmatpush1.msra.mxu0 %v873
    %1056 = vmatprep.subr.mxu0 0.0
    %1057 = vmatpush1.msra.mxu0 %v874
    %1058 = vmatprep.subr.mxu0 0.0
    %1059 = vmatpush1.msra.mxu0 %v875
    %1060 = vmatprep.subr.mxu0 0.0
    %1061 = vmatpush1.msra.mxu0 %v876
    %1062 = vmatprep.subr.mxu0 0.0
    %1063 = vmatpush1.msra.mxu0 %v877
    %1064 = vmatprep.subr.mxu0 0.0
    %1065 = vmatpush1.msra.mxu0 %v878
    %1066 = vmatprep.subr.mxu0 0.0
    %1067 = vmatpush1.msra.mxu0 %v879
    %1068 = vmatprep.subr.mxu0 0.0
    %1069 = vmatpush1.msra.mxu0 %v880
    %1070 = vmatprep.subr.mxu0 0.0
    %1071 = vmatpush1.msra.mxu0 %v881
    %1072 = vmatprep.subr.mxu0 0.0
    %1073 = vmatpush1.msra.mxu0 %v882
    %1074 = vmatprep.subr.mxu0 0.0
    %1075 = vmatpush1.msra.mxu0 %v883
    %1076 = vmatprep.subr.mxu0 0.0
    %1077 = vmatpush1.msra.mxu0 %v884
    %1078 = vmatprep.subr.mxu0 0.0
    %1079 = vmatpush1.msra.mxu0 %v885
    %1080 = vmatprep.subr.mxu0 0.0
    %1081 = vmatpush1.msra.mxu0 %v886
    %1082 = vmatprep.subr.mxu0 0.0
    %1083 = vmatpush1.msra.mxu0 %v887
    %1084 = vmatprep.subr.mxu0 0.0
    %1085 = vmatpush1.msra.mxu0 %v888
    %1086 = vmatprep.subr.mxu0 0.0
    %1087 = vmatpush1.msra.mxu0 %v889
    %1088 = vmatprep.subr.mxu0 0.0
    %1089 = vmatpush1.msra.mxu0 %v890
    %1090 = vmatprep.subr.mxu0 0.0
    %1091 = vmatpush1.msra.mxu0 %v891
    %1092 = vmatprep.subr.mxu0 0.0
    %1093 = vmatpush1.msra.mxu0 %v892
    %1094 = vmatprep.subr.mxu0 0.0
    %1095 = vmatpush1.msra.mxu0 %v893
    %1096 = vmatprep.subr.mxu0 0.0
    %1097 = vmatpush1.msra.mxu0 %v894
    %1098 = vmatprep.subr.mxu0 0.0
    %1099 = vmatpush1.msra.mxu0 %v895
    %1100 = vmatprep.mubr.f32.mxu0 %v955
    %1101 = vmatmul.mubr.f32.gmra.mrb[0].mxu0 %v953
    %v1102 = vpop.f32.mrb[0].mxu0
    %v1103 = vadd.f32 %v1033, %v1102
    %v1104 = vpop.f32.mrb[0].mxu0
    %1105 = vdwg.mxu0
    %1106 = vmatprep.subr.mxu0 0.0
    %1107 = vmatpush1.msra.mxu0 %v896
    %1108 = vmatprep.subr.mxu0 0.0
    %1109 = vmatpush1.msra.mxu0 %v897
    %1110 = vmatprep.subr.mxu0 0.0
    %1111 = vmatpush1.msra.mxu0 %v898
    %1112 = vmatprep.subr.mxu0 0.0
    %1113 = vmatpush1.msra.mxu0 %v899
    %1114 = vmatprep.subr.mxu0 0.0
    %1115 = vmatpush1.msra.mxu0 %v900
    %1116 = vmatprep.subr.mxu0 0.0
    %1117 = vmatpush1.msra.mxu0 %v901
    %1118 = vmatprep.subr.mxu0 0.0
    %1119 = vmatpush1.msra.mxu0 %v902
    %1120 = vmatprep.subr.mxu0 0.0
    %1121 = vmatpush1.msra.mxu0 %v903
    %1122 = vmatprep.subr.mxu0 0.0
    %1123 = vmatpush1.msra.mxu0 %v904
    %1124 = vmatprep.subr.mxu0 0.0
    %1125 = vmatpush1.msra.mxu0 %v905
    %1126 = vmatprep.subr.mxu0 0.0
    %1127 = vmatpush1.msra.mxu0 %v906
    %1128 = vmatprep.subr.mxu0 0.0
    %1129 = vmatpush1.msra.mxu0 %v907
    %1130 = vmatprep.subr.mxu0 0.0
    %1131 = vmatpush1.msra.mxu0 %v908
    %1132 = vmatprep.subr.mxu0 0.0
    %1133 = vmatpush1.msra.mxu0 %v909
    %1134 = vmatprep.subr.mxu0 0.0
    %1135 = vmatpush1.msra.mxu0 %v910
    %1136 = vmatprep.subr.mxu0 0.0
    %1137 = vmatpush1.msra.mxu0 %v911
    %1138 = vmatprep.subr.mxu0 0.0
    %1139 = vmatpush1.msra.mxu0 %v912
    %1140 = vmatprep.subr.mxu0 0.0
    %1141 = vmatpush1.msra.mxu0 %v913
    %1142 = vmatprep.subr.mxu0 0.0
    %1143 = vmatpush1.msra.mxu0 %v914
    %1144 = vmatprep.subr.mxu0 0.0
    %1145 = vmatpush1.msra.mxu0 %v915
    %1146 = vmatprep.subr.mxu0 0.0
    %1147 = vmatpush1.msra.mxu0 %v916
    %1148 = vmatprep.subr.mxu0 0.0
    %1149 = vmatpush1.msra.mxu0 %v917
    %1150 = vmatprep.subr.mxu0 0.0
    %1151 = vmatpush1.msra.mxu0 %v918
    %1152 = vmatprep.subr.mxu0 0.0
    %1153 = vmatpush1.msra.mxu0 %v919
    %1154 = vmatprep.subr.mxu0 0.0
    %1155 = vmatpush1.msra.mxu0 %v920
    %1156 = vmatprep.subr.mxu0 0.0
    %1157 = vmatpush1.msra.mxu0 %v921
    %1158 = vmatprep.subr.mxu0 0.0
    %1159 = vmatpush1.msra.mxu0 %v922
    %1160 = vmatprep.subr.mxu0 0.0
    %1161 = vmatpush1.msra.mxu0 %v923
    %1162 = vmatprep.subr.mxu0 0.0
    %1163 = vmatpush1.msra.mxu0 %v924
    %1164 = vmatprep.subr.mxu0 0.0
    %1165 = vmatpush1.msra.mxu0 %v925
    %1166 = vmatprep.subr.mxu0 0.0
    %1167 = vmatpush1.msra.mxu0 %v926
    %1168 = vmatprep.subr.mxu0 0.0
    %1169 = vmatpush1.msra.mxu0 %v927
    %1170 = vmatprep.mubr.f32.mxu0 %v959
    %1171 = vmatmul.mubr.f32.gmra.mrb[0].mxu0 %v957
    %v1172 = vpop.f32.mrb[0].mxu0
    %v1173 = vadd.f32 %v1103, %v1172
    %v1174 = vpop.f32.mrb[0].mxu0
    %1175 = vdwg.mxu0
    %1176 = vst [vmem:[#allocation3] sm:$0x3] %v1173
    // Predicated region
    $region22: #{tpu_custom_call.1} parent=1 // pred_check
      _
    $region23: #{tpu_custom_call.1} parent=1 // pred_check_branch
      %1178 = sbr.rel (0) target = $region25
    $region24: #{tpu_custom_call.1} parent=1 // pred_region
      %s1180 = ssub.s32 32, 32
      %1181 = vsyncadd [#allocation4], %s1180
      %s1183 = sshll.u32 [#allocation3], 4
      %s1184 = int_to_ptr.vmem [resolvable:$true] %s1183
      %1186 = dma.vmem_to_hbm [thread:$0]  %s1184, 32, %s5, [#allocation4]
    $region25: #{tpu_custom_call.1} parent=1 // pred_fallthru
      _
    // Predicated region
    $region26: #{tpu_custom_call.1} parent=1 // pred_check
      _
    $region27: #{tpu_custom_call.1} parent=1 // pred_check_branch
      %1188 = sbr.rel (0) target = $region29
    $region28: #{tpu_custom_call.1} parent=1 // pred_region
      %1189 = dma.done [#allocation4], 32
    $region29: #{tpu_custom_call.1} parent=1 // pred_fallthru
      _
    %1190 = vsyncpa [#allocation4], 1

</llo_original>
